<compile_context>
chip_gen: v7x
topology: tpu7x:2x2x1
jax: 0.10.0
libtpu: 0.0.40
codegen_flags: <defaults>
</compile_context>

<pallas_src>
import math

import jax
import jax.numpy as jnp
from jax import lax
from jax.experimental import pallas as pl
from jax.experimental.pallas import tpu as pltpu

_GELU_C = math.sqrt(2.0 / math.pi)


def _round_up(a, b):
    return (a + b - 1) // b * b


def _ffn_kernel(x_ref, gamma_ref, beta_ref, w1_ref, b1_ref, w2_ref, b2_ref,
                o_ref, xn_ref, acc_ref):
    """Grid = (token tiles [parallel], d_ff tiles [arbitrary, last])."""
    k = pl.program_id(1)
    nk = pl.num_programs(1)

    # --- once per token tile: LayerNorm(d_model, eps=1e-6) + accumulator init
    @pl.when(k == 0)
    def _():
        x = x_ref[...].astype(jnp.float32)
        mean = jnp.mean(x, axis=-1, keepdims=True)
        centered = x - mean
        var = jnp.mean(centered * centered, axis=-1, keepdims=True)
        xn = centered * lax.rsqrt(var + 1e-6)
        xn = xn * gamma_ref[...].astype(jnp.float32) + beta_ref[...].astype(jnp.float32)
        xn_ref[...] = xn.astype(xn_ref.dtype)          # cached in MXU dtype
        acc_ref[...] = jnp.zeros_like(acc_ref)

    # --- w_1 slice: (tm, d_model) @ (d_model, tff) -> (tm, tff), f32 acc
    h = jnp.dot(xn_ref[...], w1_ref[...], preferred_element_type=jnp.float32)
    h = h + b1_ref[...].astype(jnp.float32)

    # --- gelu_new: 0.5*x*(1+tanh(sqrt(2/pi)*(x+0.044715*x^3)))  (f32 VPU/EUP)
    h = 0.5 * h * (1.0 + jnp.tanh(_GELU_C * (h + 0.044715 * (h * h * h))))

    # --- w_2 slice: (tm, tff) @ (tff, d_model) accumulated into f32 scratch
    acc_ref[...] += jnp.dot(h.astype(w2_ref.dtype), w2_ref[...],
                            preferred_element_type=jnp.float32)

    # --- finalize: bias + residual, single lane-dense writeback
    @pl.when(k == nk - 1)
    def _():
        out = acc_ref[...] + b2_ref[...].astype(jnp.float32) \
              + x_ref[...].astype(jnp.float32)
        o_ref[...] = out.astype(o_ref.dtype)


def positionwise_ffn(x, gamma, beta, w1, b1, w2, b2, *,
                     tm=256, tff=512, matmul_dtype=jnp.bfloat16):
    """x: (batch, seq, d_model) float32.

    w1: (d_model, d_ff)   (already transposed vs. PyTorch's (out,in) layout)
    w2: (d_ff, d_model)
    gamma/beta: (d_model,)   b1: (d_ff,)   b2: (d_model,)
    """
    batch, seq, d_model = x.shape
    d_ff = w1.shape[1]
    M = batch * seq

    # ---- tile sizes (multiples of 8 / 128, shrunk for tiny problems) ----
    tm = _round_up(max(tm, 8), 8)
    tm_eff = max(8, min(tm, _round_up(M, 8)))
    M_pad = _round_up(M, tm_eff)

    if d_ff < 128:
        tff_eff = d_ff                       # single full-width d_ff block
        d_ff_pad = d_ff
    else:
        tff_eff = max(128, (min(tff, _round_up(d_ff, 128)) // 128) * 128)
        d_ff_pad = _round_up(d_ff, tff_eff)

    n_i = M_pad // tm_eff
    n_k = d_ff_pad // tff_eff

    # ---- host-side layout prep (pad + cast weights to MXU dtype) ----
    x2 = x.reshape(M, d_model)
    if M_pad != M:
        x2 = jnp.pad(x2, ((0, M_pad - M), (0, 0)))

    w1c = w1.astype(matmul_dtype)
    w2c = w2.astype(matmul_dtype)
    b1p = b1
    if d_ff_pad != d_ff:
        w1c = jnp.pad(w1c, ((0, 0), (0, d_ff_pad - d_ff)))
        w2c = jnp.pad(w2c, ((0, d_ff_pad - d_ff), (0, 0)))
        b1p = jnp.pad(b1, (0, d_ff_pad - d_ff))

    gamma2 = gamma.astype(jnp.float32).reshape(1, d_model)
    beta2 = beta.astype(jnp.float32).reshape(1, d_model)
    b1_2 = b1p.astype(jnp.float32).reshape(1, d_ff_pad)
    b2_2 = b2.astype(jnp.float32).reshape(1, d_model)

    # ---- VMEM budget (double-buffered streams + scratch), clamp for v7x ----
    itm = jnp.dtype(matmul_dtype).itemsize
    ixd = jnp.dtype(x.dtype).itemsize
    vmem_est = (
        2 * tm_eff * d_model * ixd                      # x tiles
        + 2 * tm_eff * d_model * ixd                    # out tiles
        + 2 * (d_model * tff_eff + tff_eff * d_model) * itm   # w1/w2 slices
        + 2 * (2 * d_model + tff_eff + d_model) * 4     # gamma/beta/b1/b2
        + tm_eff * d_model * (itm + 4)                  # xn + acc scratch
    )
    vmem_limit = int(min(max(2 * vmem_est, 32 * 1024 * 1024), 64 * 1024 * 1024))

    cost = pl.CostEstimate(
        flops=4 * M_pad * d_model * d_ff_pad,           # two matmuls
        transcendentals=M_pad * d_ff_pad,               # tanh in gelu_new
        bytes_accessed=int(
            2 * M_pad * d_model * ixd
            + n_i * (2 * d_model * d_ff_pad * itm + (d_ff_pad + 3 * d_model) * 4)),
    )

    out2 = pl.pallas_call(
        _ffn_kernel,
        out_shape=jax.ShapeDtypeStruct((M_pad, d_model), x.dtype),
        grid_spec=pltpu.PrefetchScalarGridSpec(
            num_scalar_prefetch=0,
            grid=(n_i, n_k),
            in_specs=[
                pl.BlockSpec((tm_eff, d_model), lambda i, k: (i, 0)),     # x tile
                pl.BlockSpec((1, d_model), lambda i, k: (0, 0)),          # gamma
                pl.BlockSpec((1, d_model), lambda i, k: (0, 0)),          # beta
                pl.BlockSpec((d_model, tff_eff), lambda i, k: (0, k)),    # w1 slice
                pl.BlockSpec((1, tff_eff), lambda i, k: (0, k)),          # b1 slice
                pl.BlockSpec((tff_eff, d_model), lambda i, k: (k, 0)),    # w2 slice
                pl.BlockSpec((1, d_model), lambda i, k: (0, 0)),          # b2
            ],
            out_specs=pl.BlockSpec((tm_eff, d_model), lambda i, k: (i, 0)),
            scratch_shapes=[
                pltpu.VMEM((tm_eff, d_model), matmul_dtype),   # cached LN output
                pltpu.VMEM((tm_eff, d_model), jnp.float32),    # 2nd-matmul accum
            ],
        ),
        compiler_params=pltpu.CompilerParams(
            dimension_semantics=("parallel", "arbitrary"),
            vmem_limit_bytes=vmem_limit,
        ),
        cost_estimate=cost,
    )(x2, gamma2, beta2, w1c, b1_2, w2c, b2_2)

    return out2[:M].reshape(batch, seq, d_model)


def _reference(x, gamma, beta, w1, b1, w2, b2, matmul_dtype=jnp.float32):
    """Pure-JAX reference matching the PyTorch forward (eval mode)."""
    xf = x.astype(jnp.float32)
    mean = jnp.mean(xf, axis=-1, keepdims=True)
    var = jnp.mean((xf - mean) ** 2, axis=-1, keepdims=True)
    xn = (xf - mean) * lax.rsqrt(var + 1e-6) * gamma + beta
    h = jnp.dot(xn.astype(matmul_dtype), w1.astype(matmul_dtype),
                preferred_element_type=jnp.float32) + b1
    h = 0.5 * h * (1.0 + jnp.tanh(_GELU_C * (h + 0.044715 * h ** 3)))
    out = jnp.dot(h.astype(matmul_dtype), w2.astype(matmul_dtype),
                  preferred_element_type=jnp.float32) + b2
    return out + xf


if __name__ == "__main__":
    # Small, lane-aligned demo shapes (d_model multiple of 128 as in real FFNs).
    batch, seq, d_model, d_ff = 2, 8, 128, 256

    key = jax.random.PRNGKey(0)
    kx, k1, k2, kb1, kb2 = jax.random.split(key, 5)

    x = jax.random.normal(kx, (batch, seq, d_model), dtype=jnp.float32)

    # LayerNorm params (PyTorch default init: gamma=1, beta=0)
    gamma = jnp.ones((d_model,), jnp.float32)
    beta = jnp.zeros((d_model,), jnp.float32)

    # Linear params (deterministic synthetic init; stored as (in, out))
    w1 = jax.random.normal(k1, (d_model, d_ff), dtype=jnp.float32) * (1.0 / math.sqrt(d_model))
    b1 = jax.random.normal(kb1, (d_ff,), dtype=jnp.float32) * 0.02
    w2 = jax.random.normal(k2, (d_ff, d_model), dtype=jnp.float32) * (1.0 / math.sqrt(d_ff))
    b2 = jax.random.normal(kb2, (d_model,), dtype=jnp.float32) * 0.02

    # 1) f32-MXU path, tff=128 so the streamed d_ff axis + accumulator is
    #    exercised (2 k-steps).  Tight check vs. the exact math.
    out_f32 = positionwise_ffn(x, gamma, beta, w1, b1, w2, b2,
                               tm=256, tff=128, matmul_dtype=jnp.float32)
    out_f32 = jax.block_until_ready(out_f32)
    ref_f32 = _reference(x, gamma, beta, w1, b1, w2, b2, matmul_dtype=jnp.float32)
    assert out_f32.shape == x.shape
    assert jnp.allclose(out_f32, ref_f32, atol=1e-4, rtol=1e-4), "f32 mismatch vs reference"

    # 2) Production default: bf16 MXU operands, f32 accumulation / VPU math.
    out_bf16 = positionwise_ffn(x, gamma, beta, w1, b1, w2, b2, tff=128)
    out_bf16 = jax.block_until_ready(out_bf16)
    ref_bf16 = _reference(x, gamma, beta, w1, b1, w2, b2, matmul_dtype=jnp.bfloat16)
    assert jnp.allclose(out_bf16, ref_bf16, atol=5e-3, rtol=5e-3), "bf16 mismatch vs reference"
    assert jnp.allclose(out_bf16, ref_f32, atol=5e-2, rtol=5e-2), "bf16 drifted too far from f32 math"

    print("KERNEL_OK")
</pallas_src>

<mosaic_0001>
module attributes {stable_mosaic.version = 11 : i64} {
  func.func @_ffn_kernel(%arg0: i32, %arg1: i32, %arg2: memref<16x128xf32, #tpu.memory_space<vmem>>, %arg3: memref<1x128xf32, #tpu.memory_space<vmem>>, %arg4: memref<1x128xf32, #tpu.memory_space<vmem>>, %arg5: memref<128x128xf32, #tpu.memory_space<vmem>>, %arg6: memref<1x128xf32, #tpu.memory_space<vmem>>, %arg7: memref<128x128xf32, #tpu.memory_space<vmem>>, %arg8: memref<1x128xf32, #tpu.memory_space<vmem>>, %arg9: memref<16x128xf32, #tpu.memory_space<vmem>>, %arg10: memref<16x128xf32, #tpu.memory_space<vmem>>, %arg11: memref<16x128xf32, #tpu.memory_space<vmem>>) attributes {dimension_semantics = [#tpu.dimension_semantics<parallel>, #tpu.dimension_semantics<arbitrary>], iteration_bounds = array<i64: 1, 2>, scalar_prefetch = 0 : i64, scratch_operands = 2 : i64, tpu.core_type = #tpu.core_type<tc>, window_params = [{transform_indices = @transform_0, window_bounds = array<i64: 16, 128>}, {pipeline_mode = #tpu.pipeline_mode<synchronous>, transform_indices = @transform_1, window_bounds = array<i64: 1, 128>}, {pipeline_mode = #tpu.pipeline_mode<synchronous>, transform_indices = @transform_2, window_bounds = array<i64: 1, 128>}, {transform_indices = @transform_3, window_bounds = array<i64: 128, 128>}, {transform_indices = @transform_4, window_bounds = array<i64: 1, 128>}, {transform_indices = @transform_5, window_bounds = array<i64: 128, 128>}, {pipeline_mode = #tpu.pipeline_mode<synchronous>, transform_indices = @transform_6, window_bounds = array<i64: 1, 128>}, {transform_indices = @transform_7, window_bounds = array<i64: 16, 128>}]} {
    %c0_i32 = arith.constant 0 : i32
    %0 = arith.cmpi eq, %arg1, %c0_i32 : i32
    %1 = arith.extui %0 : i1 to i32
    %c0_i32_0 = arith.constant 0 : i32
    %2 = arith.cmpi ne, %1, %c0_i32_0 : i32
    scf.if %2 {
      %c0_18 = arith.constant 0 : index
      %c0_19 = arith.constant 0 : index
      %30 = vector.load %arg2[%c0_18, %c0_19] : memref<16x128xf32, #tpu.memory_space<vmem>>, vector<16x128xf32>
      %cst_20 = arith.constant dense<0.000000e+00> : vector<16xf32>
      %31 = vector.multi_reduction <add>, %30, %cst_20 [1] : vector<16x128xf32> to vector<16xf32>
      %32 = vector.shape_cast %31 : vector<16xf32> to vector<16x1xf32>
      %cst_21 = arith.constant 1.280000e+02 : f32
      %33 = vector.broadcast %cst_21 : f32 to vector<16x1xf32>
      %34 = arith.divf %32, %33 : vector<16x1xf32>
      %35 = vector.broadcast %34 : vector<16x1xf32> to vector<16x128xf32>
      %36 = arith.subf %30, %35 : vector<16x128xf32>
      %37 = arith.mulf %36, %36 : vector<16x128xf32>
      %cst_22 = arith.constant dense<0.000000e+00> : vector<16xf32>
      %38 = vector.multi_reduction <add>, %37, %cst_22 [1] : vector<16x128xf32> to vector<16xf32>
      %39 = vector.shape_cast %38 : vector<16xf32> to vector<16x1xf32>
      %cst_23 = arith.constant 1.280000e+02 : f32
      %40 = vector.broadcast %cst_23 : f32 to vector<16x1xf32>
      %41 = arith.divf %39, %40 : vector<16x1xf32>
      %cst_24 = arith.constant 9.99999997E-7 : f32
      %42 = vector.broadcast %cst_24 : f32 to vector<16x1xf32>
      %43 = arith.addf %41, %42 : vector<16x1xf32>
      %44 = math.rsqrt %43 : vector<16x1xf32>
      %45 = vector.broadcast %44 : vector<16x1xf32> to vector<16x128xf32>
      %46 = arith.mulf %36, %45 : vector<16x128xf32>
      %c0_25 = arith.constant 0 : index
      %c0_26 = arith.constant 0 : index
      %47 = vector.load %arg3[%c0_25, %c0_26] : memref<1x128xf32, #tpu.memory_space<vmem>>, vector<1x128xf32>
      %48 = vector.broadcast %47 : vector<1x128xf32> to vector<16x128xf32>
      %49 = arith.mulf %46, %48 : vector<16x128xf32>
      %c0_27 = arith.constant 0 : index
      %c0_28 = arith.constant 0 : index
      %50 = vector.load %arg4[%c0_27, %c0_28] : memref<1x128xf32, #tpu.memory_space<vmem>>, vector<1x128xf32>
      %51 = vector.broadcast %50 : vector<1x128xf32> to vector<16x128xf32>
      %52 = arith.addf %49, %51 : vector<16x128xf32>
      %c0_29 = arith.constant 0 : index
      %c0_30 = arith.constant 0 : index
      %53 = vector.load %arg10[%c0_29, %c0_30] : memref<16x128xf32, #tpu.memory_space<vmem>>, vector<16x128xf32>
      tpu.vector_store %arg10[%c0_29, %c0_30], %52 {strides = array<i32>} : memref<16x128xf32, #tpu.memory_space<vmem>>, vector<16x128xf32>,
      %cst_31 = arith.constant 0.000000e+00 : f32
      %54 = vector.broadcast %cst_31 : f32 to vector<16x128xf32>
      %c0_32 = arith.constant 0 : index
      %c0_33 = arith.constant 0 : index
      %55 = vector.load %arg11[%c0_32, %c0_33] : memref<16x128xf32, #tpu.memory_space<vmem>>, vector<16x128xf32>
      tpu.vector_store %arg11[%c0_32, %c0_33], %54 {strides = array<i32>} : memref<16x128xf32, #tpu.memory_space<vmem>>, vector<16x128xf32>,
    } else {
    }
    %c0 = arith.constant 0 : index
    %c0_1 = arith.constant 0 : index
    %3 = vector.load %arg10[%c0, %c0_1] : memref<16x128xf32, #tpu.memory_space<vmem>>, vector<16x128xf32>
    %c0_2 = arith.constant 0 : index
    %c0_3 = arith.constant 0 : index
    %4 = vector.load %arg5[%c0_2, %c0_3] : memref<128x128xf32, #tpu.memory_space<vmem>>, vector<128x128xf32>
    %cst = arith.constant dense<0.000000e+00> : vector<16x128xf32>
    %5 = tpu.matmul %3, %4, %cst {dimension_numbers = #tpu.dot_dimension_numbers<[1], [0], [0], [1], [0, 0, 1, 1], [], []>} : vector<16x128xf32>, vector<128x128xf32>, vector<16x128xf32> -> vector<16x128xf32>
    %c0_4 = arith.constant 0 : index
    %c0_5 = arith.constant 0 : index
    %6 = vector.load %arg6[%c0_4, %c0_5] : memref<1x128xf32, #tpu.memory_space<vmem>>, vector<1x128xf32>
    %7 = vector.broadcast %6 : vector<1x128xf32> to vector<16x128xf32>
    %8 = arith.addf %5, %7 : vector<16x128xf32>
    %cst_6 = arith.constant 5.000000e-01 : f32
    %9 = vector.broadcast %cst_6 : f32 to vector<16x128xf32>
    %10 = arith.mulf %9, %8 : vector<16x128xf32>
    %11 = arith.mulf %8, %8 : vector<16x128xf32>
    %12 = arith.mulf %11, %8 : vector<16x128xf32>
    %cst_7 = arith.constant 4.471500e-02 : f32
    %13 = vector.broadcast %cst_7 : f32 to vector<16x128xf32>
    %14 = arith.mulf %13, %12 : vector<16x128xf32>
    %15 = arith.addf %8, %14 : vector<16x128xf32>
    %cst_8 = arith.constant 0.797884583 : f32
    %16 = vector.broadcast %cst_8 : f32 to vector<16x128xf32>
    %17 = arith.mulf %16, %15 : vector<16x128xf32>
    %18 = math.tanh %17 : vector<16x128xf32>
    %cst_9 = arith.constant 1.000000e+00 : f32
    %19 = vector.broadcast %cst_9 : f32 to vector<16x128xf32>
    %20 = arith.addf %19, %18 : vector<16x128xf32>
    %21 = arith.mulf %10, %20 : vector<16x128xf32>
    %c0_10 = arith.constant 0 : index
    %c0_11 = arith.constant 0 : index
    %22 = vector.load %arg11[%c0_10, %c0_11] : memref<16x128xf32, #tpu.memory_space<vmem>>, vector<16x128xf32>
    %c0_12 = arith.constant 0 : index
    %c0_13 = arith.constant 0 : index
    %23 = vector.load %arg7[%c0_12, %c0_13] : memref<128x128xf32, #tpu.memory_space<vmem>>, vector<128x128xf32>
    %cst_14 = arith.constant dense<0.000000e+00> : vector<16x128xf32>
    %24 = tpu.matmul %21, %23, %cst_14 {dimension_numbers = #tpu.dot_dimension_numbers<[1], [0], [0], [1], [0, 0, 1, 1], [], []>} : vector<16x128xf32>, vector<128x128xf32>, vector<16x128xf32> -> vector<16x128xf32>
    %25 = arith.addf %22, %24 : vector<16x128xf32>
    %c0_15 = arith.constant 0 : index
    %c0_16 = arith.constant 0 : index
    %26 = vector.load %arg11[%c0_15, %c0_16] : memref<16x128xf32, #tpu.memory_space<vmem>>, vector<16x128xf32>
    tpu.vector_store %arg11[%c0_15, %c0_16], %25 {strides = array<i32>} : memref<16x128xf32, #tpu.memory_space<vmem>>, vector<16x128xf32>,
    %c1_i32 = arith.constant 1 : i32
    %27 = arith.cmpi eq, %arg1, %c1_i32 : i32
    %28 = arith.extui %27 : i1 to i32
    %c0_i32_17 = arith.constant 0 : i32
    %29 = arith.cmpi ne, %28, %c0_i32_17 : i32
    scf.if %29 {
      %c0_18 = arith.constant 0 : index
      %c0_19 = arith.constant 0 : index
      %30 = vector.load %arg11[%c0_18, %c0_19] : memref<16x128xf32, #tpu.memory_space<vmem>>, vector<16x128xf32>
      %c0_20 = arith.constant 0 : index
      %c0_21 = arith.constant 0 : index
      %31 = vector.load %arg8[%c0_20, %c0_21] : memref<1x128xf32, #tpu.memory_space<vmem>>, vector<1x128xf32>
      %32 = vector.broadcast %31 : vector<1x128xf32> to vector<16x128xf32>
      %33 = arith.addf %30, %32 : vector<16x128xf32>
      %c0_22 = arith.constant 0 : index
      %c0_23 = arith.constant 0 : index
      %34 = vector.load %arg2[%c0_22, %c0_23] : memref<16x128xf32, #tpu.memory_space<vmem>>, vector<16x128xf32>
      %35 = arith.addf %33, %34 : vector<16x128xf32>
      %c0_24 = arith.constant 0 : index
      %c0_25 = arith.constant 0 : index
      %36 = vector.load %arg9[%c0_24, %c0_25] : memref<16x128xf32, #tpu.memory_space<vmem>>, vector<16x128xf32>
      tpu.vector_store %arg9[%c0_24, %c0_25], %35 {strides = array<i32>} : memref<16x128xf32, #tpu.memory_space<vmem>>, vector<16x128xf32>,
    } else {
    }
    return
  }
  func.func @transform_0(%arg0: i32, %arg1: i32) -> (i32, i32) {
    %c0_i32 = arith.constant 0 : i32
    %c0_i32_0 = arith.constant 0 : i32
    return %arg0, %c0_i32 : i32, i32
  }
  func.func @transform_1(%arg0: i32, %arg1: i32) -> (i32, i32) {
    %c0_i32 = arith.constant 0 : i32
    %c0_i32_0 = arith.constant 0 : i32
    %c0_i32_1 = arith.constant 0 : i32
    return %c0_i32, %c0_i32_0 : i32, i32
  }
  func.func @transform_2(%arg0: i32, %arg1: i32) -> (i32, i32) {
    %c0_i32 = arith.constant 0 : i32
    %c0_i32_0 = arith.constant 0 : i32
    %c0_i32_1 = arith.constant 0 : i32
    return %c0_i32, %c0_i32_0 : i32, i32
  }
  func.func @transform_3(%arg0: i32, %arg1: i32) -> (i32, i32) {
    %c0_i32 = arith.constant 0 : i32
    %c0_i32_0 = arith.constant 0 : i32
    return %c0_i32, %arg1 : i32, i32
  }
  func.func @transform_4(%arg0: i32, %arg1: i32) -> (i32, i32) {
    %c0_i32 = arith.constant 0 : i32
    %c0_i32_0 = arith.constant 0 : i32
    return %c0_i32, %arg1 : i32, i32
  }
  func.func @transform_5(%arg0: i32, %arg1: i32) -> (i32, i32) {
    %c0_i32 = arith.constant 0 : i32
    %c0_i32_0 = arith.constant 0 : i32
    return %arg1, %c0_i32 : i32, i32
  }
  func.func @transform_6(%arg0: i32, %arg1: i32) -> (i32, i32) {
    %c0_i32 = arith.constant 0 : i32
    %c0_i32_0 = arith.constant 0 : i32
    %c0_i32_1 = arith.constant 0 : i32
    return %c0_i32, %c0_i32_0 : i32, i32
  }
  func.func @transform_7(%arg0: i32, %arg1: i32) -> (i32, i32) {
    %c0_i32 = arith.constant 0 : i32
    %c0_i32_0 = arith.constant 0 : i32
    return %arg0, %c0_i32 : i32, i32
  }
}

</mosaic_0001>

<llo_original>
// kernel: tpu_custom_call.1
$region0: #{tpu_custom_call.1}
  #allocation0 [shape = 'u32[]', space=smem, size = 0x4, offset = 0x4, fixed_abs, tag = 'smem constant byte address 0x4 - core index']
  #allocation1 [shape = 'u32[144,128]{1,0:T(1,128)}', space=vmem, size = 0x12000, scoped, tag = 'internal scratch']
  #allocation2 [shape = 'f32[16,128]{1,0:T(8,128)}', space=vmem, size = 0x2000, scoped, tag = 'scratch operand']
  #allocation3 [shape = 'f32[16,128]{1,0:T(8,128)}', space=vmem, size = 0x2000, scoped, tag = 'scratch operand']
  %s0 = inlined_call_operand.hbm [shape: f32[16,128], index: 0, kind: input, shape index: {}]
  %s1 = inlined_call_operand.vmem [shape: f32[1,128], index: 1, kind: input, shape index: {}]
  %s2 = inlined_call_operand.vmem [shape: f32[1,128], index: 2, kind: input, shape index: {}]
  %s3 = inlined_call_operand.hbm [shape: f32[128,256], index: 3, kind: input, shape index: {}]
  %s4 = inlined_call_operand.vmem [shape: f32[1,256], index: 4, kind: input, shape index: {}]
  %s5 = inlined_call_operand.hbm [shape: f32[256,128], index: 5, kind: input, shape index: {}]
  %s6 = inlined_call_operand.vmem [shape: f32[1,128], index: 6, kind: input, shape index: {}]
  %s7 = inlined_call_operand.hbm [shape: f32[16,128], index: 7, kind: output, shape index: {}]
  %s8 = sld [smem:[#allocation0]]
  $region81: #{tpu_custom_call.1} parent=0
    _
  %s10 = ssub.s32 1, %s8
  %s11 = scalar_select 0, %s10, %s8
  $region1: #{tpu_custom_call.1} parent=0
    #allocation4 [shape = 'u8[8192]{0}', space=vmem, size = 0x2000, scoped, tag = 'input window, operand 0, single buffered']
    #allocation5 [shape = 's32[2]{0}', space=sflag, size = 0x8, scoped, tag = 'scoped memory for tpu_custom_call.1']
    #allocation6 [shape = 's32[2]{0}', space=sflag, size = 0x8, scoped, tag = 'scoped memory for tpu_custom_call.1']
    #allocation7 [shape = 'u8[131072]{0}', space=vmem, size = 0x20000, scoped, tag = 'input window, operand 3']
    #allocation8 [shape = 's32[2]{0}', space=sflag, size = 0x8, scoped, tag = 'scoped memory for tpu_custom_call.1']
    #allocation9 [shape = 'u8[131072]{0}', space=vmem, size = 0x20000, scoped, tag = 'input window, operand 5']
    #allocation10 [shape = 'u8[8192]{0}', space=vmem, size = 0x2000, scoped, tag = 'output window, operand 0, single buffered']
    %12 = vsyncpa [#allocation5], 0
    %13 = vsyncpa [#allocation8], 0
    %s14 = scalar_lea.sflag [#allocation8], 1
    %15 = vsyncpa %s14, 0
    %16 = vsyncpa [#allocation6], 0
    loop: start=0, step=1, limit=4
    $region2: #{tpu_custom_call.1} parent=1 // loop_pre_header
      _
    $region3: #{tpu_custom_call.1} parent=1 // loop_header
      %s18 = sphi 0, %s22
      %p19 = scmp.ge.s32.totalorder %s18, 4
      %s25 = sphi 0, %s37
      %s26 = sphi 0, %s33
      %s27 = sphi 0, %s25
      %s28 = sphi 0, %s26
      %s29 = sphi 0, %s27
      %s30 = sphi 0, %s28
      %s40 = sphi 0, %s42
      %s43 = sphi 0, %s40
      %s44 = sphi 0, %s43
      %s60 = sphi 0, %s44
      %s64 = sphi 0, %s64
      %s66 = sphi 0, %s64
      %s67 = sphi 0, %s66
      %s81 = sphi 0, %s67
      %s85 = sphi 0, %s85
      %s87 = sphi 0, %s85
      %s88 = sphi 0, %s87
      %s102 = sphi 0, %s88
      %s108 = sphi 0, %s110
      %s111 = sphi 0, %s108
      %s112 = sphi 0, %s111
      %s128 = sphi 0, %s112
      %s134 = sphi 0, %s136
      %s137 = sphi 0, %s134
      %s138 = sphi 0, %s137
      %s154 = sphi 0, %s138
      %s160 = sphi 0, %s162
      %s163 = sphi 0, %s160
      %s164 = sphi 0, %s163
      %s180 = sphi 0, %s164
      %s184 = sphi 0, %s184
      %s186 = sphi 0, %s184
      %s187 = sphi 0, %s186
      %s201 = sphi 0, %s187
      %s207 = sphi 0, %s209
      %s210 = sphi 0, %s207
      %s211 = sphi 0, %s210
      %s227 = sphi 0, %s211
    $region4: #{tpu_custom_call.1} parent=1 // loop_header_branch
      %21 = sbr.rel (%p19) target = $region8
    $region5: #{tpu_custom_call.1} parent=1 // loop_body
      %s23 = ssub.s32 %s18, 1
      %s24 = ssub.s32 %s18, 2
      %s31 = sadd.s32 1, %s26
      %p32 = scmp.ge.s32.totalorder %s31, 2
      %s33 = scalar_select %p32, 0, %s31
      %s34 = sadd.s32 1, %s25
      %s35 = scalar_select %p32, %s34, %s25
      %p36 = scmp.ge.s32.totalorder %s35, 1
      %s37 = scalar_select %p36, 0, %s35
      %s38 = ssub.s32 %s25, %s37
      %p39 = scmp.eq.s32.totalorder %s38, 0
      %s41 = sadd.s32 %s40, 1
      %s42 = scalar_select %p39, %s40, %s41
      %p45 = pneg %p39
      %p46 = scmp.eq.s32.totalorder %s18, 1
      %p47 = por %p45, %p46
      %p48 = scmp.ne.s32.totalorder %s40, %s43
      %p49 = scmp.eq.s32.totalorder %s18, 0
      %p50 = por %p48, %p49
      %p51 = scmp.ne.s32.totalorder %s40, %s43
      %p52 = scmp.eq.s32.totalorder %s23, 1
      %p53 = por %p51, %p52
      %p54 = scmp.ne.s32.totalorder %s43, %s44
      %p55 = scmp.eq.s32.totalorder %s23, 0
      %p56 = por %p54, %p55
      %p57 = scmp.ne.s32.totalorder %s43, %s44
      %p58 = scmp.eq.s32.totalorder %s24, 1
      %p59 = por %p57, %p58
      %p61 = scmp.ne.s32.totalorder %s44, %s60
      %p62 = scmp.eq.s32.totalorder %s24, 0
      %p63 = por %p61, %p62
      %s65 = sadd.s32 %s64, 1
      %p68 = scmp.eq.s32.totalorder %s18, 1
      %p69 = scmp.ne.s32.totalorder %s64, %s66
      %p70 = scmp.eq.s32.totalorder %s18, 0
      %p71 = por %p69, %p70
      %p72 = scmp.ne.s32.totalorder %s64, %s66
      %p73 = scmp.eq.s32.totalorder %s23, 1
      %p74 = por %p72, %p73
      %p75 = scmp.ne.s32.totalorder %s66, %s67
      %p76 = scmp.eq.s32.totalorder %s23, 0
      %p77 = por %p75, %p76
      %p78 = scmp.ne.s32.totalorder %s66, %s67
      %p79 = scmp.eq.s32.totalorder %s24, 1
      %p80 = por %p78, %p79
      %p82 = scmp.ne.s32.totalorder %s67, %s81
      %p83 = scmp.eq.s32.totalorder %s24, 0
      %p84 = por %p82, %p83
      %s86 = sadd.s32 %s85, 1
      %p89 = scmp.eq.s32.totalorder %s18, 1
      %p90 = scmp.ne.s32.totalorder %s85, %s87
      %p91 = scmp.eq.s32.totalorder %s18, 0
      %p92 = por %p90, %p91
      %p93 = scmp.ne.s32.totalorder %s85, %s87
      %p94 = scmp.eq.s32.totalorder %s23, 1
      %p95 = por %p93, %p94
      %p96 = scmp.ne.s32.totalorder %s87, %s88
      %p97 = scmp.eq.s32.totalorder %s23, 0
      %p98 = por %p96, %p97
      %p99 = scmp.ne.s32.totalorder %s87, %s88
      %p100 = scmp.eq.s32.totalorder %s24, 1
      %p101 = por %p99, %p100
      %p103 = scmp.ne.s32.totalorder %s88, %s102
      %p104 = scmp.eq.s32.totalorder %s24, 0
      %p105 = por %p103, %p104
      %s106 = ssub.s32 %s26, %s33
      %p107 = scmp.eq.s32.totalorder %s106, 0
      %s109 = sadd.s32 %s108, 1
      %s110 = scalar_select %p107, %s108, %s109
      %p113 = pneg %p107
      %p114 = scmp.eq.s32.totalorder %s18, 1
      %p115 = por %p113, %p114
      %p116 = scmp.ne.s32.totalorder %s108, %s111
      %p117 = scmp.eq.s32.totalorder %s18, 0
      %p118 = por %p116, %p117
      %p119 = scmp.ne.s32.totalorder %s108, %s111
      %p120 = scmp.eq.s32.totalorder %s23, 1
      %p121 = por %p119, %p120
      %p122 = scmp.ne.s32.totalorder %s111, %s112
      %p123 = scmp.eq.s32.totalorder %s23, 0
      %p124 = por %p122, %p123
      %p125 = scmp.ne.s32.totalorder %s111, %s112
      %p126 = scmp.eq.s32.totalorder %s24, 1
      %p127 = por %p125, %p126
      %p129 = scmp.ne.s32.totalorder %s112, %s128
      %p130 = scmp.eq.s32.totalorder %s24, 0
      %p131 = por %p129, %p130
      %s132 = ssub.s32 %s26, %s33
      %p133 = scmp.eq.s32.totalorder %s132, 0
      %s135 = sadd.s32 %s134, 1
      %s136 = scalar_select %p133, %s134, %s135
      %p139 = pneg %p133
      %p140 = scmp.eq.s32.totalorder %s18, 1
      %p141 = por %p139, %p140
      %p142 = scmp.ne.s32.totalorder %s134, %s137
      %p143 = scmp.eq.s32.totalorder %s18, 0
      %p144 = por %p142, %p143
      %p145 = scmp.ne.s32.totalorder %s134, %s137
      %p146 = scmp.eq.s32.totalorder %s23, 1
      %p147 = por %p145, %p146
      %p148 = scmp.ne.s32.totalorder %s137, %s138
      %p149 = scmp.eq.s32.totalorder %s23, 0
      %p150 = por %p148, %p149
      %p151 = scmp.ne.s32.totalorder %s137, %s138
      %p152 = scmp.eq.s32.totalorder %s24, 1
      %p153 = por %p151, %p152
      %p155 = scmp.ne.s32.totalorder %s138, %s154
      %p156 = scmp.eq.s32.totalorder %s24, 0
      %p157 = por %p155, %p156
      %s158 = ssub.s32 %s26, %s33
      %p159 = scmp.eq.s32.totalorder %s158, 0
      %s161 = sadd.s32 %s160, 1
      %s162 = scalar_select %p159, %s160, %s161
      %p165 = pneg %p159
      %p166 = scmp.eq.s32.totalorder %s18, 1
      %p167 = por %p165, %p166
      %p168 = scmp.ne.s32.totalorder %s160, %s163
      %p169 = scmp.eq.s32.totalorder %s18, 0
      %p170 = por %p168, %p169
      %p171 = scmp.ne.s32.totalorder %s160, %s163
      %p172 = scmp.eq.s32.totalorder %s23, 1
      %p173 = por %p171, %p172
      %p174 = scmp.ne.s32.totalorder %s163, %s164
      %p175 = scmp.eq.s32.totalorder %s23, 0
      %p176 = por %p174, %p175
      %p177 = scmp.ne.s32.totalorder %s163, %s164
      %p178 = scmp.eq.s32.totalorder %s24, 1
      %p179 = por %p177, %p178
      %p181 = scmp.ne.s32.totalorder %s164, %s180
      %p182 = scmp.eq.s32.totalorder %s24, 0
      %p183 = por %p181, %p182
      %s185 = sadd.s32 %s184, 1
      %p188 = scmp.eq.s32.totalorder %s18, 1
      %p189 = scmp.ne.s32.totalorder %s184, %s186
      %p190 = scmp.eq.s32.totalorder %s18, 0
      %p191 = por %p189, %p190
      %p192 = scmp.ne.s32.totalorder %s184, %s186
      %p193 = scmp.eq.s32.totalorder %s23, 1
      %p194 = por %p192, %p193
      %p195 = scmp.ne.s32.totalorder %s186, %s187
      %p196 = scmp.eq.s32.totalorder %s23, 0
      %p197 = por %p195, %p196
      %p198 = scmp.ne.s32.totalorder %s186, %s187
      %p199 = scmp.eq.s32.totalorder %s24, 1
      %p200 = por %p198, %p199
      %p202 = scmp.ne.s32.totalorder %s187, %s201
      %p203 = scmp.eq.s32.totalorder %s24, 0
      %p204 = por %p202, %p203
      %s205 = ssub.s32 %s25, %s37
      %p206 = scmp.eq.s32.totalorder %s205, 0
      %s208 = sadd.s32 %s207, 1
      %s209 = scalar_select %p206, %s207, %s208
      %p212 = pneg %p206
      %p213 = scmp.eq.s32.totalorder %s18, 1
      %p214 = por %p212, %p213
      %p215 = scmp.ne.s32.totalorder %s207, %s210
      %p216 = scmp.eq.s32.totalorder %s18, 0
      %p217 = por %p215, %p216
      %p218 = scmp.ne.s32.totalorder %s207, %s210
      %p219 = scmp.eq.s32.totalorder %s23, 1
      %p220 = por %p218, %p219
      %p221 = scmp.ne.s32.totalorder %s210, %s211
      %p222 = scmp.eq.s32.totalorder %s23, 0
      %p223 = por %p221, %p222
      %p224 = scmp.ne.s32.totalorder %s210, %s211
      %p225 = scmp.eq.s32.totalorder %s24, 1
      %p226 = por %p224, %p225
      %p228 = scmp.ne.s32.totalorder %s211, %s227
      %p229 = scmp.eq.s32.totalorder %s24, 0
      %p230 = por %p228, %p229
      %p231 = scmp.le.s32.totalorder 1, %s18
      %p232 = scmp.lt.s32.totalorder %s18, 3
      %p233 = pnand %p231, %p232
      %p234 = pneg %p233
      // Predicated region
      $region9: #{tpu_custom_call.1} parent=5 // pred_check
        _
      $region10: #{tpu_custom_call.1} parent=5 // pred_check_branch
        %236 = sbr.rel (%p233) target = $region12
      $region11: #{tpu_custom_call.1} parent=5 // pred_region
        %s237 = ssub.s32 %s18, 1
        // Predicated region
        $region13: #{tpu_custom_call.1} parent=11 // pred_check
          %p238 = pneg %p56
        $region14: #{tpu_custom_call.1} parent=11 // pred_check_branch
          %240 = sbr.rel (%p238) target = $region16
        $region15: #{tpu_custom_call.1} parent=11 // pred_region
          %s241 = smul.u32 2, %s27
          %s243 = ssub.s32 256, 256
          %244 = vsyncadd [#allocation5], %s243
          %s245 = smul.addr %s241, 128
          %s246 = scalar_lea.hbm %s0, %s245
          %s247 = sshll.u32 [#allocation4], 4
          %s248 = int_to_ptr.vmem [resolvable:$true] %s247
          %253 = dma.hbm_to_vmem [thread:$0]  %s246, 256, %s248, [#allocation5], 128, 128, 8
        $region16: #{tpu_custom_call.1} parent=11 // pred_fallthru
          _
        // Predicated region
        $region17: #{tpu_custom_call.1} parent=11 // pred_check
          %p254 = pneg %p77
        $region18: #{tpu_custom_call.1} parent=11 // pred_check_branch
          %256 = sbr.rel (%p254) target = $region20
        $region19: #{tpu_custom_call.1} parent=11 // pred_region
          _
        $region20: #{tpu_custom_call.1} parent=11 // pred_fallthru
          _
        // Predicated region
        $region21: #{tpu_custom_call.1} parent=11 // pred_check
          %p257 = pneg %p98
        $region22: #{tpu_custom_call.1} parent=11 // pred_check_branch
          %259 = sbr.rel (%p257) target = $region24
        $region23: #{tpu_custom_call.1} parent=11 // pred_region
          _
        $region24: #{tpu_custom_call.1} parent=11 // pred_fallthru
          _
        // Predicated region
        $region25: #{tpu_custom_call.1} parent=11 // pred_check
          %p260 = pneg %p197
        $region26: #{tpu_custom_call.1} parent=11 // pred_check_branch
          %262 = sbr.rel (%p260) target = $region28
        $region27: #{tpu_custom_call.1} parent=11 // pred_region
          _
        $region28: #{tpu_custom_call.1} parent=11 // pred_fallthru
          _
      $region12: #{tpu_custom_call.1} parent=5 // pred_fallthru
        _
      %p263 = scmp.lt.s32.totalorder %s18, 2
      // Predicated region
      $region29: #{tpu_custom_call.1} parent=5 // pred_check
        %p264 = pneg %p263
      $region30: #{tpu_custom_call.1} parent=5 // pred_check_branch
        %266 = sbr.rel (%p264) target = $region32
      $region31: #{tpu_custom_call.1} parent=5 // pred_region
        // Predicated region
        $region33: #{tpu_custom_call.1} parent=31 // pred_check
          %p267 = pneg %p118
        $region34: #{tpu_custom_call.1} parent=31 // pred_check_branch
          %269 = sbr.rel (%p267) target = $region36
        $region35: #{tpu_custom_call.1} parent=31 // pred_region
          %s270 = sand.u32 %s18, 1
          %s271 = scalar_lea.sflag [#allocation8], %s270
          %s272 = sand.u32 %s108, 1
          %s273 = smul.addr %s272, 128
          %s274 = scalar_lea.vmem [#allocation7], %s273
          %s276 = ssub.s32 2048, 2048
          %277 = vsyncadd %s271, %s276
          %s278 = smul.addr %s26, 128
          %s279 = scalar_lea.hbm %s3, %s278
          %s280 = sshll.u32 %s274, 4
          %s281 = int_to_ptr.vmem [resolvable:$true] %s280
          %286 = dma.hbm_to_vmem [thread:$0]  %s279, 2048, %s281, %s271, 256, 128, 8
        $region36: #{tpu_custom_call.1} parent=31 // pred_fallthru
          _
        // Predicated region
        $region37: #{tpu_custom_call.1} parent=31 // pred_check
          %p287 = pneg %p144
        $region38: #{tpu_custom_call.1} parent=31 // pred_check_branch
          %289 = sbr.rel (%p287) target = $region40
        $region39: #{tpu_custom_call.1} parent=31 // pred_region
          %p290 = scmp.lt.s32.totalorder %s26, 1
          %s291 = scalar_select %p290, %s26, 1
          %s292 = scalar_lea.vmem %s4, %s291
        $region40: #{tpu_custom_call.1} parent=31 // pred_fallthru
          _
        // Predicated region
        $region41: #{tpu_custom_call.1} parent=31 // pred_check
          %p293 = pneg %p170
        $region42: #{tpu_custom_call.1} parent=31 // pred_check_branch
          %295 = sbr.rel (%p293) target = $region44
        $region43: #{tpu_custom_call.1} parent=31 // pred_region
          %s296 = sand.u32 %s18, 1
          %s297 = scalar_lea.sflag [#allocation8], %s296
          %s298 = sand.u32 %s160, 1
          %s299 = smul.addr %s298, 128
          %s300 = scalar_lea.vmem [#allocation9], %s299
          %s301 = smul.u32 16, %s26
          %s303 = ssub.s32 2048, 2048
          %304 = vsyncadd %s297, %s303
          %s305 = smul.addr %s301, 128
          %s306 = scalar_lea.hbm %s5, %s305
          %s307 = sshll.u32 %s300, 4
          %s308 = int_to_ptr.vmem [resolvable:$true] %s307
          %313 = dma.hbm_to_vmem [thread:$0]  %s306, 2048, %s308, %s297, 128, 128, 8
        $region44: #{tpu_custom_call.1} parent=31 // pred_fallthru
          _
      $region32: #{tpu_custom_call.1} parent=5 // pred_fallthru
        _
      %p314 = scmp.le.s32.totalorder 1, %s18
      %p315 = scmp.lt.s32.totalorder %s18, 3
      %p316 = pnand %p314, %p315
      %p317 = pneg %p316
      // Predicated region
      $region45: #{tpu_custom_call.1} parent=5 // pred_check
        _
      $region46: #{tpu_custom_call.1} parent=5 // pred_check_branch
        %319 = sbr.rel (%p316) target = $region48
      $region47: #{tpu_custom_call.1} parent=5 // pred_region
        %s320 = ssub.s32 %s18, 1
        // Predicated region
        $region49: #{tpu_custom_call.1} parent=47 // pred_check
          %p321 = pneg %p56
        $region50: #{tpu_custom_call.1} parent=47 // pred_check_branch
          %323 = sbr.rel (%p321) target = $region52
        $region51: #{tpu_custom_call.1} parent=47 // pred_region
          %324 = dma.done [#allocation5], 256
        $region52: #{tpu_custom_call.1} parent=47 // pred_fallthru
          _
        %s325 = sand.u32 %s23, 1
        %s326 = scalar_lea.sflag [#allocation8], %s325
        %s327 = sand.u32 %s111, 1
        %s328 = smul.addr %s327, 128
        %s329 = scalar_lea.vmem [#allocation7], %s328
        // Predicated region
        $region53: #{tpu_custom_call.1} parent=47 // pred_check
          %p330 = pneg %p124
        $region54: #{tpu_custom_call.1} parent=47 // pred_check_branch
          %332 = sbr.rel (%p330) target = $region56
        $region55: #{tpu_custom_call.1} parent=47 // pred_region
          %333 = dma.done %s326, 2048
        $region56: #{tpu_custom_call.1} parent=47 // pred_fallthru
          _
        %s334 = sand.u32 %s23, 1
        %s335 = scalar_lea.sflag [#allocation8], %s334
        %s336 = sand.u32 %s163, 1
        %s337 = smul.addr %s336, 128
        %s338 = scalar_lea.vmem [#allocation9], %s337
        // Predicated region
        $region57: #{tpu_custom_call.1} parent=47 // pred_check
          %p339 = pneg %p176
        $region58: #{tpu_custom_call.1} parent=47 // pred_check_branch
          %341 = sbr.rel (%p339) target = $region60
        $region59: #{tpu_custom_call.1} parent=47 // pred_region
          %342 = dma.done %s335, 2048
        $region60: #{tpu_custom_call.1} parent=47 // pred_fallthru
          _
        %p343 = pneg %p56
        %p344 = pneg %p53
        %p345 = pneg %p77
        %p346 = pneg %p74
        %p347 = pneg %p98
        %p348 = pneg %p95
        %s349 = sand.u32 %s23, 1
        %s350 = scalar_lea.sflag [#allocation8], %s349
        %s351 = sand.u32 %s111, 1
        %s352 = smul.addr %s351, 128
        %s353 = scalar_lea.vmem [#allocation7], %s352
        %p354 = pneg %p124
        %p355 = pneg %p121
        %p356 = scmp.lt.s32.totalorder %s28, 1
        %s357 = scalar_select %p356, %s28, 1
        %s358 = scalar_lea.vmem %s4, %s357
        %p359 = pneg %p150
        %p360 = pneg %p147
        %s361 = sand.u32 %s23, 1
        %s362 = scalar_lea.sflag [#allocation8], %s361
        %s363 = sand.u32 %s163, 1
        %s364 = smul.addr %s363, 128
        %s365 = scalar_lea.vmem [#allocation9], %s364
        %p366 = pneg %p176
        %p367 = pneg %p173
        %p368 = pneg %p197
        %p369 = pneg %p194
        %p370 = pneg %p223
        %p371 = pneg %p220
        %s372 = smul.u32 2, %s27
        %p373 = scmp.lt.s32.totalorder %s28, 1
        %s374 = scalar_select %p373, %s28, 1
        %s375 = scalar_lea.vmem %s4, %s374
        %s376 = smul.u32 16, %s28
        %s377 = smul.u32 2, %s27
        %p378 = scmp.eq.s32.totalorder %s28, 0
        // Predicated region
        $region61: #{tpu_custom_call.1} parent=47 // pred_check
          %p379 = pneg %p378
        $region62: #{tpu_custom_call.1} parent=47 // pred_check_branch
          %381 = sbr.rel (%p379) target = $region64
        $region63: #{tpu_custom_call.1} parent=47 // pred_region
          %v382 = vld [vmem:[#allocation4] sm:$0xff]
          %v383 = vld [vmem:[#allocation4 + $0x8] sm:$0xff]
          %384 = vadd.xlane.f32.xlu0 %v382
          %v385 = vpop.xlane.xlu0 %384
          %386 = vadd.xlane.f32.xlu0 %v383
          %v387 = vpop.xlane.xlu0 %386
          %v388 = vrcp.pop 128.0
          %v389 = vmul.f32 %v385, %v388
          %v390 = vmul.f32 %v387, %v388
          %v391 = vsub.f32 %v382, %v389
          %v392 = vsub.f32 %v383, %v390
          %v393 = vmul.f32 %v391, %v391
          %v394 = vmul.f32 %v392, %v392
          %395 = vadd.xlane.f32.xlu0 %v393
          %v396 = vpop.xlane.xlu0 %395
          %397 = vadd.xlane.f32.xlu0 %v394
          %v398 = vpop.xlane.xlu0 %397
          %v399 = vmul.f32 %v396, %v388
          %v400 = vmul.f32 %v398, %v388
          %v401 = vadd.f32 %v399, 1e-06
          %v402 = vadd.f32 %v400, 1e-06
          %v403 = vrsqrt.pop %v401
          %v404 = vrsqrt.pop %v402
          %v405 = vmul.f32 %v391, %v403
          %v406 = vmul.f32 %v392, %v404
          %v407 = vld [vmem:[%s1] sm:$0x1]
          %v409 = vlaneseq
          %v410 = vshrl.u32 %v409, 7
          %v411 = vsub.s32 0, %v410
          %v412 = vrot.slane %v407, %v411
          %v414 = vmul.f32 %v405, %v412
          %v415 = vmul.f32 %v406, %v412
          %v416 = vld [vmem:[%s2] sm:$0x1]
          %v418 = vlaneseq
          %v419 = vshrl.u32 %v418, 7
          %v420 = vsub.s32 0, %v419
          %v421 = vrot.slane %v416, %v420
          %v423 = vadd.f32 %v414, %v421
          %v424 = vadd.f32 %v415, %v421
          %425 = vst [vmem:[#allocation2] sm:$0xff] %v423
          %426 = vst [vmem:[#allocation2 + $0x8] sm:$0xff] %v424
          %427 = vst [vmem:[#allocation3] sm:$0xff] 0.0
          %428 = vst [vmem:[#allocation3 + $0x8] sm:$0xff] 0.0
        $region64: #{tpu_custom_call.1} parent=47 // pred_fallthru
          _
        %v429 = vld [vmem:[#allocation2] sm:$0xff]
        %v430 = vld [vmem:[#allocation2 + $0x8] sm:$0xff]
        %v431 = vld [vmem:[%s329] sm:$0xff]
        %v432 = vld [vmem:[%s329 + $0x8] sm:$0xff]
        %v433 = vld [vmem:[%s329 + $0x10] sm:$0xff]
        %v434 = vld [vmem:[%s329 + $0x18] sm:$0xff]
        %v435 = vld [vmem:[%s329 + $0x20] sm:$0xff]
        %v436 = vld [vmem:[%s329 + $0x28] sm:$0xff]
        %v437 = vld [vmem:[%s329 + $0x30] sm:$0xff]
        %v438 = vld [vmem:[%s329 + $0x38] sm:$0xff]
        %v439 = vld [vmem:[%s329 + $0x40] sm:$0xff]
        %v440 = vld [vmem:[%s329 + $0x48] sm:$0xff]
        %v441 = vld [vmem:[%s329 + $0x50] sm:$0xff]
        %v442 = vld [vmem:[%s329 + $0x58] sm:$0xff]
        %v443 = vld [vmem:[%s329 + $0x60] sm:$0xff]
        %v444 = vld [vmem:[%s329 + $0x68] sm:$0xff]
        %v445 = vld [vmem:[%s329 + $0x70] sm:$0xff]
        %v446 = vld [vmem:[%s329 + $0x78] sm:$0xff]
        %v447 = vld [vmem:[%s375] sm:$0x1]
        %v449 = vlaneseq
        %v450 = vshrl.u32 %v449, 7
        %v451 = vsub.s32 0, %v450
        %v452 = vrot.slane %v447, %v451
        %454 = vmatprep.subr.mxu0 0.0
        %455 = vmatpush1.msra.mxu0 %v431
        %456 = vmatprep.subr.mxu0 0.0
        %457 = vmatpush1.msra.mxu0 %v432
        %458 = vmatprep.subr.mxu0 0.0
        %459 = vmatpush1.msra.mxu0 %v433
        %460 = vmatprep.subr.mxu0 0.0
        %461 = vmatpush1.msra.mxu0 %v434
        %462 = vmatprep.subr.mxu0 0.0
        %463 = vmatpush1.msra.mxu0 %v435
        %464 = vmatprep.subr.mxu0 0.0
        %465 = vmatpush1.msra.mxu0 %v436
        %466 = vmatprep.subr.mxu0 0.0
        %467 = vmatpush1.msra.mxu0 %v437
        %468 = vmatprep.subr.mxu0 0.0
        %469 = vmatpush1.msra.mxu0 %v438
        %470 = vmatprep.subr.mxu0 0.0
        %471 = vmatpush1.msra.mxu0 %v439
        %472 = vmatprep.subr.mxu0 0.0
        %473 = vmatpush1.msra.mxu0 %v440
        %474 = vmatprep.subr.mxu0 0.0
        %475 = vmatpush1.msra.mxu0 %v441
        %476 = vmatprep.subr.mxu0 0.0
        %477 = vmatpush1.msra.mxu0 %v442
        %478 = vmatprep.subr.mxu0 0.0
        %479 = vmatpush1.msra.mxu0 %v443
        %480 = vmatprep.subr.mxu0 0.0
        %481 = vmatpush1.msra.mxu0 %v444
        %482 = vmatprep.subr.mxu0 0.0
        %483 = vmatpush1.msra.mxu0 %v445
        %484 = vmatprep.subr.mxu0 0.0
        %485 = vmatpush1.msra.mxu0 %v446
        %486 = vmatprep.subr.mxu0 0.0
        %487 = vmatpush1.msra.mxu0 0.0
        %488 = vmatprep.subr.mxu0 0.0
        %489 = vmatpush1.msra.mxu0 0.0
        %490 = vmatprep.subr.mxu0 0.0
        %491 = vmatpush1.msra.mxu0 0.0
        %492 = vmatprep.subr.mxu0 0.0
        %493 = vmatpush1.msra.mxu0 0.0
        %494 = vmatprep.subr.mxu0 0.0
        %495 = vmatpush1.msra.mxu0 0.0
        %496 = vmatprep.subr.mxu0 0.0
        %497 = vmatpush1.msra.mxu0 0.0
        %498 = vmatprep.subr.mxu0 0.0
        %499 = vmatpush1.msra.mxu0 0.0
        %500 = vmatprep.subr.mxu0 0.0
        %501 = vmatpush1.msra.mxu0 0.0
        %502 = vmatprep.subr.mxu0 0.0
        %503 = vmatpush1.msra.mxu0 0.0
        %504 = vmatprep.subr.mxu0 0.0
        %505 = vmatpush1.msra.mxu0 0.0
        %506 = vmatprep.subr.mxu0 0.0
        %507 = vmatpush1.msra.mxu0 0.0
        %508 = vmatprep.subr.mxu0 0.0
        %509 = vmatpush1.msra.mxu0 0.0
        %510 = vmatprep.subr.mxu0 0.0
        %511 = vmatpush1.msra.mxu0 0.0
        %512 = vmatprep.subr.mxu0 0.0
        %513 = vmatpush1.msra.mxu0 0.0
        %514 = vmatprep.subr.mxu0 0.0
        %515 = vmatpush1.msra.mxu0 0.0
        %516 = vmatprep.subr.mxu0 0.0
        %517 = vmatpush1.msra.mxu0 0.0
        %518 = vmatprep.mubr.f32.mxu0 0.0
        %519 = vmatmul.mubr.f32.gmra.mrb[0].mxu0 %v429
        %v520 = vpop.f32.mrb[0].mxu0
        %v521 = vadd.f32 %v452, %v520
        %v522 = vpop.f32.mrb[0].mxu0
        %523 = vmatprep.mubr.f32.mxu0 0.0
        %524 = vmatmul.mubr.f32.gmra.mrb[0].mxu0 %v430
        %v525 = vpop.f32.mrb[0].mxu0
        %v526 = vadd.f32 %v452, %v525
        %v527 = vpop.f32.mrb[0].mxu0
        %528 = vdwg.mxu0
        %v529 = vmul.f32 %v521, 0.5
        %v530 = vmul.f32 %v526, 0.5
        %v531 = vmul.f32 %v521, %v521
        %v532 = vmul.f32 %v526, %v526
        %v533 = vmul.f32 %v531, %v521
        %v534 = vmul.f32 %v532, %v526
        %v535 = vmul.f32 %v533, 0.044715
        %v536 = vmul.f32 %v534, 0.044715
        %v537 = vadd.f32 %v521, %v535
        %v538 = vadd.f32 %v526, %v536
        %v539 = vmul.f32 %v537, 0.7978846
        %v540 = vmul.f32 %v538, 0.7978846
        %v541 = vtanh.pop %v539
        %v542 = vtanh.pop %v540
        %v543 = vadd.f32 %v541, 1.0
        %v544 = vadd.f32 %v542, 1.0
        %v545 = vmul.f32 %v529, %v543
        %v546 = vmul.f32 %v530, %v544
        %v547 = vld [vmem:[#allocation3] sm:$0xff]
        %v548 = vld [vmem:[#allocation3 + $0x8] sm:$0xff]
        %v549 = vld [vmem:[%s338] sm:$0xff]
        %v550 = vld [vmem:[%s338 + $0x8] sm:$0xff]
        %v551 = vld [vmem:[%s338 + $0x10] sm:$0xff]
        %v552 = vld [vmem:[%s338 + $0x18] sm:$0xff]
        %v553 = vld [vmem:[%s338 + $0x20] sm:$0xff]
        %v554 = vld [vmem:[%s338 + $0x28] sm:$0xff]
        %v555 = vld [vmem:[%s338 + $0x30] sm:$0xff]
        %v556 = vld [vmem:[%s338 + $0x38] sm:$0xff]
        %v557 = vld [vmem:[%s338 + $0x40] sm:$0xff]
        %v558 = vld [vmem:[%s338 + $0x48] sm:$0xff]
        %v559 = vld [vmem:[%s338 + $0x50] sm:$0xff]
        %v560 = vld [vmem:[%s338 + $0x58] sm:$0xff]
        %v561 = vld [vmem:[%s338 + $0x60] sm:$0xff]
        %v562 = vld [vmem:[%s338 + $0x68] sm:$0xff]
        %v563 = vld [vmem:[%s338 + $0x70] sm:$0xff]
        %v564 = vld [vmem:[%s338 + $0x78] sm:$0xff]
        %565 = vmatprep.subr.mxu0 0.0
        %566 = vmatpush1.msra.mxu0 %v549
        %567 = vmatprep.subr.mxu0 0.0
        %568 = vmatpush1.msra.mxu0 %v550
        %569 = vmatprep.subr.mxu0 0.0
        %570 = vmatpush1.msra.mxu0 %v551
        %571 = vmatprep.subr.mxu0 0.0
        %572 = vmatpush1.msra.mxu0 %v552
        %573 = vmatprep.subr.mxu0 0.0
        %574 = vmatpush1.msra.mxu0 %v553
        %575 = vmatprep.subr.mxu0 0.0
        %576 = vmatpush1.msra.mxu0 %v554
        %577 = vmatprep.subr.mxu0 0.0
        %578 = vmatpush1.msra.mxu0 %v555
        %579 = vmatprep.subr.mxu0 0.0
        %580 = vmatpush1.msra.mxu0 %v556
        %581 = vmatprep.subr.mxu0 0.0
        %582 = vmatpush1.msra.mxu0 %v557
        %583 = vmatprep.subr.mxu0 0.0
        %584 = vmatpush1.msra.mxu0 %v558
        %585 = vmatprep.subr.mxu0 0.0
        %586 = vmatpush1.msra.mxu0 %v559
        %587 = vmatprep.subr.mxu0 0.0
        %588 = vmatpush1.msra.mxu0 %v560
        %589 = vmatprep.subr.mxu0 0.0
        %590 = vmatpush1.msra.mxu0 %v561
        %591 = vmatprep.subr.mxu0 0.0
        %592 = vmatpush1.msra.mxu0 %v562
        %593 = vmatprep.subr.mxu0 0.0
        %594 = vmatpush1.msra.mxu0 %v563
        %595 = vmatprep.subr.mxu0 0.0
        %596 = vmatpush1.msra.mxu0 %v564
        %597 = vmatprep.subr.mxu0 0.0
        %598 = vmatpush1.msra.mxu0 0.0
        %599 = vmatprep.subr.mxu0 0.0
        %600 = vmatpush1.msra.mxu0 0.0
        %601 = vmatprep.subr.mxu0 0.0
        %602 = vmatpush1.msra.mxu0 0.0
        %603 = vmatprep.subr.mxu0 0.0
        %604 = vmatpush1.msra.mxu0 0.0
        %605 = vmatprep.subr.mxu0 0.0
        %606 = vmatpush1.msra.mxu0 0.0
        %607 = vmatprep.subr.mxu0 0.0
        %608 = vmatpush1.msra.mxu0 0.0
        %609 = vmatprep.subr.mxu0 0.0
        %610 = vmatpush1.msra.mxu0 0.0
        %611 = vmatprep.subr.mxu0 0.0
        %612 = vmatpush1.msra.mxu0 0.0
        %613 = vmatprep.subr.mxu0 0.0
        %614 = vmatpush1.msra.mxu0 0.0
        %615 = vmatprep.subr.mxu0 0.0
        %616 = vmatpush1.msra.mxu0 0.0
        %617 = vmatprep.subr.mxu0 0.0
        %618 = vmatpush1.msra.mxu0 0.0
        %619 = vmatprep.subr.mxu0 0.0
        %620 = vmatpush1.msra.mxu0 0.0
        %621 = vmatprep.subr.mxu0 0.0
        %622 = vmatpush1.msra.mxu0 0.0
        %623 = vmatprep.subr.mxu0 0.0
        %624 = vmatpush1.msra.mxu0 0.0
        %625 = vmatprep.subr.mxu0 0.0
        %626 = vmatpush1.msra.mxu0 0.0
        %627 = vmatprep.subr.mxu0 0.0
        %628 = vmatpush1.msra.mxu0 0.0
        %629 = vmatprep.mubr.f32.mxu0 0.0
        %630 = vmatmul.mubr.f32.gmra.mrb[0].mxu0 %v545
        %v631 = vpop.f32.mrb[0].mxu0
        %v632 = vadd.f32 0.0, %v631
        %v633 = vpop.f32.mrb[0].mxu0
        %634 = vmatprep.mubr.f32.mxu0 0.0
        %635 = vmatmul.mubr.f32.gmra.mrb[0].mxu0 %v546
        %v636 = vpop.f32.mrb[0].mxu0
        %v637 = vadd.f32 0.0, %v636
        %v638 = vpop.f32.mrb[0].mxu0
        %639 = vdwg.mxu0
        %v640 = vadd.f32 %v547, %v632
        %v641 = vadd.f32 %v548, %v637
        %642 = vst [vmem:[#allocation3] sm:$0xff] %v640
        %643 = vst [vmem:[#allocation3 + $0x8] sm:$0xff] %v641
        %p644 = scmp.eq.s32.totalorder %s28, 1
        // Predicated region
        $region65: #{tpu_custom_call.1} parent=47 // pred_check
          %p645 = pneg %p644
        $region66: #{tpu_custom_call.1} parent=47 // pred_check_branch
          %647 = sbr.rel (%p645) target = $region68
        $region67: #{tpu_custom_call.1} parent=47 // pred_region
          %v648 = vld [vmem:[#allocation3] sm:$0xff]
          %v649 = vld [vmem:[#allocation3 + $0x8] sm:$0xff]
          %v650 = vld [vmem:[%s6] sm:$0x1]
          %v652 = vlaneseq
          %v653 = vshrl.u32 %v652, 7
          %v654 = vsub.s32 0, %v653
          %v655 = vrot.slane %v650, %v654
          %v657 = vadd.f32 %v648, %v655
          %v658 = vadd.f32 %v649, %v655
          %v659 = vld [vmem:[#allocation4] sm:$0xff]
          %v660 = vld [vmem:[#allocation4 + $0x8] sm:$0xff]
          %v661 = vadd.f32 %v657, %v659
          %v662 = vadd.f32 %v658, %v660
          %663 = vst [vmem:[#allocation10] sm:$0xff] %v661
          %664 = vst [vmem:[#allocation10 + $0x8] sm:$0xff] %v662
        $region68: #{tpu_custom_call.1} parent=47 // pred_fallthru
          _
        // Predicated region
        $region69: #{tpu_custom_call.1} parent=47 // pred_check
          %p665 = pneg %p220
        $region70: #{tpu_custom_call.1} parent=47 // pred_check_branch
          %667 = sbr.rel (%p665) target = $region72
        $region71: #{tpu_custom_call.1} parent=47 // pred_region
          %s668 = smul.u32 2, %s27
          %s670 = ssub.s32 256, 256
          %671 = vsyncadd [#allocation6], %s670
          %s672 = smul.addr %s668, 128
          %s673 = scalar_lea.hbm %s7, %s672
          %s674 = sshll.u32 [#allocation10], 4
          %s675 = int_to_ptr.vmem [resolvable:$true] %s674
          %680 = dma.vmem_to_hbm [thread:$0]  %s675, 256, %s673, [#allocation6], 128, 128, 8
        $region72: #{tpu_custom_call.1} parent=47 // pred_fallthru
          _
        // Predicated region
        $region73: #{tpu_custom_call.1} parent=47 // pred_check
          %p681 = pneg %p220
        $region74: #{tpu_custom_call.1} parent=47 // pred_check_branch
          %683 = sbr.rel (%p681) target = $region76
        $region75: #{tpu_custom_call.1} parent=47 // pred_region
          %684 = dma.done [#allocation6], 256
        $region76: #{tpu_custom_call.1} parent=47 // pred_fallthru
          _
      $region48: #{tpu_custom_call.1} parent=5 // pred_fallthru
        _
      %p685 = scmp.le.s32.totalorder 2, %s18
      // Predicated region
      $region77: #{tpu_custom_call.1} parent=5 // pred_check
        %p686 = pneg %p685
      $region78: #{tpu_custom_call.1} parent=5 // pred_check_branch
        %688 = sbr.rel (%p686) target = $region80
      $region79: #{tpu_custom_call.1} parent=5 // pred_region
        %s689 = ssub.s32 %s18, 2
      $region80: #{tpu_custom_call.1} parent=5 // pred_fallthru
        _
    $region6: #{tpu_custom_call.1} parent=1 // loop_footer
      %s22 = sadd.s32 1, %s18
    $region7: #{tpu_custom_call.1} parent=1 // loop_footer_branch
      %17 = sbr.rel target = $region3
    $region8: #{tpu_custom_call.1} parent=1 // loop_exit
      _
    %690 = vsyncpa [#allocation5], 1
    %s691 = scalar_lea.sflag [#allocation5], 1
    %692 = vsyncpa %s691, 1
    %693 = vsyncpa [#allocation8], 1
    %s694 = scalar_lea.sflag [#allocation8], 1
    %695 = vsyncpa %s694, 1
    %696 = vsyncpa [#allocation6], 1
    %s697 = scalar_lea.sflag [#allocation6], 1
    %698 = vsyncpa %s697, 1

</llo_original>
